<compile_context>
chip_gen: v7x
topology: tpu7x:2x2x1
jax: 0.10.0
libtpu: 0.0.40
codegen_flags: <defaults>
</compile_context>

<pallas_src>
import functools

import jax
import jax.numpy as jnp
from jax.experimental import pallas as pl
from jax.experimental.pallas import tpu as pltpu

_DEFAULT_EPS = 1e-5


def _round_up(n, m):
    return (n + m - 1) // m * m


def _lnglu_res_kernel(x_ref, p_ref, *rest, eps, sub_rows, n_sub, packed):
    """One grid step: a (tile_rows, W) slab, processed sub_rows rows at a time."""
    if packed:
        seg_ref, o_ref = rest
        seg = seg_ref[...]                       # (W, W) block-diag averaging matrix
    else:
        (o_ref,) = rest
        seg = None

    p = p_ref[...]                               # (4, W) float32: [w1; w2; b1; b2]
    W = p.shape[-1]
    # Hoist the parameter broadcasts out of the sub-chunk loop.
    w1 = jnp.broadcast_to(p[0:1, :], (sub_rows, W))
    w2 = jnp.broadcast_to(p[1:2, :], (sub_rows, W))
    b1 = jnp.broadcast_to(p[2:3, :], (sub_rows, W))
    b2 = jnp.broadcast_to(p[3:4, :], (sub_rows, W))

    def process(r0):
        rows = pl.ds(r0, sub_rows)
        x = x_ref[rows, :].astype(jnp.float32)   # (sub_rows, W)

        if packed:
            # Segmented (per original row) mean / variance via MXU matmul with a
            # block-diagonal 1/D matrix; results are already broadcast per segment.
            mean = jnp.dot(x, seg, preferred_element_type=jnp.float32,
                           precision=jax.lax.Precision.HIGHEST)
            xc = x - mean
            var = jnp.dot(xc * xc, seg, preferred_element_type=jnp.float32,
                          precision=jax.lax.Precision.HIGHEST)
        else:
            # Lane axis is the full normalized axis: plain XLU reductions.
            mean = jnp.mean(x, axis=-1, keepdims=True)
            xc = x - mean
            var = jnp.mean(xc * xc, axis=-1, keepdims=True)

        denom = jnp.sqrt(var) + eps              # (std + eps), matches the module
        inv = pl.reciprocal(denom, approx=True)  # EUP seed
        inv = inv * (2.0 - denom * inv)          # one Newton step -> f32 accurate
        xn = xc * inv

        g1 = b1 + w1 * xn
        g2 = b2 + w2 * xn
        # sigmoid via exp (EUP) + approx reciprocal (EUP) + Newton; clamp keeps
        # exp finite so the Newton step never sees inf.
        t = 1.0 + jnp.exp(-jnp.maximum(g1, -60.0))
        sig = pl.reciprocal(t, approx=True)
        sig = sig * (2.0 - t * sig)

        o_ref[rows, :] = (sig * g2 + x).astype(o_ref.dtype)

    if n_sub == 1:
        process(0)
    else:
        def body(s, carry):
            process(pl.multiple_of(s * sub_rows, sub_rows))
            return carry
        jax.lax.fori_loop(0, n_sub, body, 0)


def res_lnglu(x, weight, bias, *, eps=_DEFAULT_EPS,
              block_bytes=2 * 1024 * 1024, sub_block_bytes=128 * 1024):
    """x: (..., D). weight/bias: (D, 2) as in nn.LayerNorm((D, 2))."""
    orig_shape = x.shape
    D = orig_shape[-1]
    x2d = x.reshape(-1, D)
    N = x2d.shape[0]

    # ---- lane packing: fold k rows into one 128-lane-dense super-row ----------
    k = (128 // D) if (D < 128 and 128 % D == 0) else 1
    W = k * D

    # ---- pack the four parameter vectors into a single (4, W) block -----------
    p = jnp.stack([weight[:, 0], weight[:, 1], bias[:, 0], bias[:, 1]], axis=0)
    p = jnp.tile(p, (1, k)).astype(jnp.float32)

    # ---- tiling: big outer block (DMA efficiency), small inner sub-chunk ------
    row_f32 = W * 4
    sub_rows = max(8, sub_block_bytes // row_f32 // 8 * 8)
    tile_rows = max(sub_rows, block_bytes // row_f32 // sub_rows * sub_rows)

    R = pl.cdiv(N, k)                                  # super-rows of real data
    sub_rows = min(sub_rows, _round_up(R, 8))
    tile_rows = max(sub_rows, min(tile_rows, _round_up(R, sub_rows)))
    # Keep >= 2 grid steps when the data allows it (v7x: 2 TensorCores).
    if _round_up(R, tile_rows) == tile_rows and tile_rows > sub_rows:
        tile_rows = max(sub_rows, _round_up(pl.cdiv(R, 2), sub_rows))
    n_sub = tile_rows // sub_rows

    R_pad = _round_up(R, tile_rows)
    N_pad = R_pad * k
    if N_pad != N:                                     # zero padding is safe: +eps
        x2d = jnp.pad(x2d, ((0, N_pad - N), (0, 0)))
    xs = x2d.reshape(R_pad, W)

    grid = (R_pad // tile_rows,)
    row_spec = pl.BlockSpec((tile_rows, W), lambda i: (i, 0))

    in_specs = [row_spec, pl.BlockSpec((4, W), lambda i: (0, 0))]
    args = [xs, p]
    if k > 1:
        # Block-diagonal averaging matrix: (x @ seg) broadcasts each D-segment's mean.
        seg = jnp.kron(jnp.eye(k, dtype=jnp.float32),
                       jnp.full((D, D), 1.0 / D, dtype=jnp.float32))
        in_specs.append(pl.BlockSpec((W, W), lambda i: (0, 0)))
        args.append(seg)

    io_bytes = tile_rows * W * x.dtype.itemsize
    vmem_limit = int(min(48 * 1024 * 1024,
                         max(32 * 1024 * 1024,
                             4 * io_bytes + 64 * sub_rows * W * 4)))

    kernel = functools.partial(_lnglu_res_kernel, eps=float(eps),
                               sub_rows=sub_rows, n_sub=n_sub, packed=(k > 1))

    out = pl.pallas_call(
        kernel,
        out_shape=jax.ShapeDtypeStruct((R_pad, W), x.dtype),
        grid_spec=pltpu.PrefetchScalarGridSpec(
            num_scalar_prefetch=0,
            grid=grid,
            in_specs=in_specs,
            out_specs=row_spec,
        ),
        compiler_params=pltpu.CompilerParams(
            dimension_semantics=("parallel",),
            vmem_limit_bytes=vmem_limit,
        ),
    )(*args)

    return out.reshape(N_pad, D)[:N].reshape(orig_shape)


if __name__ == "__main__":
    key = jax.random.PRNGKey(0)

    def make_params(kp, D):
        kw, kb = jax.random.split(kp)
        bound = 1.0 / (D ** 0.5)
        weight = jax.random.uniform(kw, (D, 2), minval=-bound, maxval=bound,
                                    dtype=jnp.float32)
        bias = 0.1 * jax.random.normal(kb, (D, 2), dtype=jnp.float32)
        return weight, bias

    def reference(x, weight, bias, eps):
        mean = jnp.mean(x, axis=-1, keepdims=True)
        std = jnp.sqrt(jnp.mean((x - mean) ** 2, axis=-1, keepdims=True))
        xn = (x - mean) / (std + eps)
        g = bias + weight * xn[..., None]
        return jax.nn.sigmoid(g[..., 0]) * g[..., 1] + x

    cases = [
        ((2, 8, 32), 32),    # packed lane-dense path (k = 4)
        ((3, 5, 32), 32),    # packed path with row padding (batch*seq not divisible)
        ((2, 8, 256), 256),  # dense path (D already a multiple of 128)
    ]
    for shape, D in cases:
        key, kx, kp = jax.random.split(key, 3)
        x = jax.random.normal(kx, shape, dtype=jnp.float32)
        weight, bias = make_params(kp, D)

        y = res_lnglu(x, weight, bias)
        jax.block_until_ready(y)

        ref = reference(x, weight, bias, _DEFAULT_EPS)
        assert y.shape == x.shape
        assert jnp.allclose(y, ref, atol=2e-5, rtol=2e-5), f"mismatch for {shape}"

    print("KERNEL_OK")
</pallas_src>

<mosaic_0001>
module attributes {stable_mosaic.version = 11 : i64} {
  func.func @_lnglu_res_kernel(%arg0: i32, %arg1: memref<8x128xf32, #tpu.memory_space<vmem>>, %arg2: memref<4x128xf32, #tpu.memory_space<vmem>>, %arg3: memref<128x128xf32, #tpu.memory_space<vmem>>, %arg4: memref<8x128xf32, #tpu.memory_space<vmem>>) attributes {dimension_semantics = [#tpu.dimension_semantics<parallel>], iteration_bounds = array<i64: 1>, scalar_prefetch = 0 : i64, scratch_operands = 0 : i64, tpu.core_type = #tpu.core_type<tc>, window_params = [{transform_indices = @transform_0, window_bounds = array<i64: 8, 128>}, {pipeline_mode = #tpu.pipeline_mode<synchronous>, transform_indices = @transform_1, window_bounds = array<i64: 4, 128>}, {pipeline_mode = #tpu.pipeline_mode<synchronous>, transform_indices = @transform_2, window_bounds = array<i64: 128, 128>}, {transform_indices = @transform_3, window_bounds = array<i64: 8, 128>}]} {
    %c0 = arith.constant 0 : index
    %c0_0 = arith.constant 0 : index
    %0 = vector.load %arg3[%c0, %c0_0] : memref<128x128xf32, #tpu.memory_space<vmem>>, vector<128x128xf32>
    %c0_1 = arith.constant 0 : index
    %c0_2 = arith.constant 0 : index
    %1 = vector.load %arg2[%c0_1, %c0_2] : memref<4x128xf32, #tpu.memory_space<vmem>>, vector<4x128xf32>
    %2 = vector.extract_strided_slice %1 {offsets = [0, 0], sizes = [1, 128], strides = [1, 1]} : vector<4x128xf32> to vector<1x128xf32>
    %3 = vector.shape_cast %2 : vector<1x128xf32> to vector<1x128xf32>
    %4 = vector.broadcast %3 : vector<1x128xf32> to vector<8x128xf32>
    %5 = vector.extract_strided_slice %1 {offsets = [1, 0], sizes = [1, 128], strides = [1, 1]} : vector<4x128xf32> to vector<1x128xf32>
    %6 = vector.shape_cast %5 : vector<1x128xf32> to vector<1x128xf32>
    %7 = vector.broadcast %6 : vector<1x128xf32> to vector<8x128xf32>
    %8 = vector.extract_strided_slice %1 {offsets = [2, 0], sizes = [1, 128], strides = [1, 1]} : vector<4x128xf32> to vector<1x128xf32>
    %9 = vector.shape_cast %8 : vector<1x128xf32> to vector<1x128xf32>
    %10 = vector.broadcast %9 : vector<1x128xf32> to vector<8x128xf32>
    %11 = vector.extract_strided_slice %1 {offsets = [3, 0], sizes = [1, 128], strides = [1, 1]} : vector<4x128xf32> to vector<1x128xf32>
    %12 = vector.shape_cast %11 : vector<1x128xf32> to vector<1x128xf32>
    %13 = vector.broadcast %12 : vector<1x128xf32> to vector<8x128xf32>
    %c0_3 = arith.constant 0 : index
    %c0_4 = arith.constant 0 : index
    %14 = vector.load %arg1[%c0_3, %c0_4] : memref<8x128xf32, #tpu.memory_space<vmem>>, vector<8x128xf32>
    %cst = arith.constant dense<0.000000e+00> : vector<8x128xf32>
    %15 = tpu.matmul %14, %0, %cst {dimension_numbers = #tpu.dot_dimension_numbers<[1], [0], [0], [1], [0, 0, 1, 1], [], []>, precision = #tpu.contract_precision<fp32>} : vector<8x128xf32>, vector<128x128xf32>, vector<8x128xf32> -> vector<8x128xf32>
    %16 = arith.subf %14, %15 : vector<8x128xf32>
    %17 = arith.mulf %16, %16 : vector<8x128xf32>
    %cst_5 = arith.constant dense<0.000000e+00> : vector<8x128xf32>
    %18 = tpu.matmul %17, %0, %cst_5 {dimension_numbers = #tpu.dot_dimension_numbers<[1], [0], [0], [1], [0, 0, 1, 1], [], []>, precision = #tpu.contract_precision<fp32>} : vector<8x128xf32>, vector<128x128xf32>, vector<8x128xf32> -> vector<8x128xf32>
    %19 = math.sqrt %18 : vector<8x128xf32>
    %cst_6 = arith.constant 9.99999974E-6 : f32
    %20 = vector.broadcast %cst_6 : f32 to vector<8x128xf32>
    %21 = arith.addf %19, %20 : vector<8x128xf32>
    %22 = tpu.reciprocal %21 {approx = true} : vector<8x128xf32> -> vector<8x128xf32>
    %23 = arith.mulf %21, %22 : vector<8x128xf32>
    %cst_7 = arith.constant 2.000000e+00 : f32
    %24 = vector.broadcast %cst_7 : f32 to vector<8x128xf32>
    %25 = arith.subf %24, %23 : vector<8x128xf32>
    %26 = arith.mulf %22, %25 : vector<8x128xf32>
    %27 = arith.mulf %16, %26 : vector<8x128xf32>
    %28 = arith.mulf %4, %27 : vector<8x128xf32>
    %29 = arith.addf %10, %28 : vector<8x128xf32>
    %30 = arith.mulf %7, %27 : vector<8x128xf32>
    %31 = arith.addf %13, %30 : vector<8x128xf32>
    %cst_8 = arith.constant -6.000000e+01 : f32
    %32 = vector.broadcast %cst_8 : f32 to vector<8x128xf32>
    %33 = arith.maximumf %29, %32 : vector<8x128xf32>
    %cst_9 = arith.constant 0.000000e+00 : f32
    %34 = vector.broadcast %cst_9 : f32 to vector<8x128xf32>
    %35 = arith.subf %34, %33 : vector<8x128xf32>
    %36 = math.exp %35 : vector<8x128xf32>
    %cst_10 = arith.constant 1.000000e+00 : f32
    %37 = vector.broadcast %cst_10 : f32 to vector<8x128xf32>
    %38 = arith.addf %37, %36 : vector<8x128xf32>
    %39 = tpu.reciprocal %38 {approx = true} : vector<8x128xf32> -> vector<8x128xf32>
    %40 = arith.mulf %38, %39 : vector<8x128xf32>
    %cst_11 = arith.constant 2.000000e+00 : f32
    %41 = vector.broadcast %cst_11 : f32 to vector<8x128xf32>
    %42 = arith.subf %41, %40 : vector<8x128xf32>
    %43 = arith.mulf %39, %42 : vector<8x128xf32>
    %44 = arith.mulf %43, %31 : vector<8x128xf32>
    %45 = arith.addf %44, %14 : vector<8x128xf32>
    %c0_12 = arith.constant 0 : index
    %c0_13 = arith.constant 0 : index
    %46 = vector.load %arg4[%c0_12, %c0_13] : memref<8x128xf32, #tpu.memory_space<vmem>>, vector<8x128xf32>
    tpu.vector_store %arg4[%c0_12, %c0_13], %45 {strides = array<i32>} : memref<8x128xf32, #tpu.memory_space<vmem>>, vector<8x128xf32>,
    return
  }
  func.func @transform_0(%arg0: i32) -> (i32, i32) {
    %c0_i32 = arith.constant 0 : i32
    %c0_i32_0 = arith.constant 0 : i32
    return %arg0, %c0_i32 : i32, i32
  }
  func.func @transform_1(%arg0: i32) -> (i32, i32) {
    %c0_i32 = arith.constant 0 : i32
    %c0_i32_0 = arith.constant 0 : i32
    %c0_i32_1 = arith.constant 0 : i32
    return %c0_i32, %c0_i32_0 : i32, i32
  }
  func.func @transform_2(%arg0: i32) -> (i32, i32) {
    %c0_i32 = arith.constant 0 : i32
    %c0_i32_0 = arith.constant 0 : i32
    %c0_i32_1 = arith.constant 0 : i32
    return %c0_i32, %c0_i32_0 : i32, i32
  }
  func.func @transform_3(%arg0: i32) -> (i32, i32) {
    %c0_i32 = arith.constant 0 : i32
    %c0_i32_0 = arith.constant 0 : i32
    return %arg0, %c0_i32 : i32, i32
  }
}

</mosaic_0001>

<llo_original>
// kernel: tpu_custom_call.1
$region0: #{tpu_custom_call.1}
  #allocation0 [shape = 'u32[]', space=smem, size = 0x4, offset = 0x4, fixed_abs, tag = 'smem constant byte address 0x4 - core index']
  #allocation1 [shape = 'u32[144,128]{1,0:T(1,128)}', space=vmem, size = 0x12000, scoped, tag = 'internal scratch']
  %s0 = inlined_call_operand.hbm [shape: f32[8,128], index: 0, kind: input, shape index: {}]
  %s1 = inlined_call_operand.hbm [shape: f32[4,128], index: 1, kind: input, shape index: {}]
  %s2 = inlined_call_operand.hbm [shape: f32[128,128], index: 2, kind: input, shape index: {}]
  %s3 = inlined_call_operand.hbm [shape: f32[8,128], index: 3, kind: output, shape index: {}]
  %s4 = sld [smem:[#allocation0]]
  $region34: #{tpu_custom_call.1} parent=0
    _
  %s6 = ssub.s32 1, %s4
  %s7 = scalar_select 0, %s6, %s4
  $region1: #{tpu_custom_call.1} parent=0
    #allocation2 [shape = 'u8[4096]{0}', space=vmem, size = 0x1000, scoped, tag = 'input window, operand 0, single buffered']
    #allocation3 [shape = 's32[1]{0}', space=sflag, size = 0x4, scoped, tag = 'scoped memory for tpu_custom_call.1']
    #allocation4 [shape = 's32[1]{0}', space=sflag, size = 0x4, scoped, tag = 'scoped memory for tpu_custom_call.1']
    #allocation5 [shape = 'u8[2048]{0}', space=vmem, size = 0x800, scoped, tag = 'input window, operand 1, single buffered']
    #allocation6 [shape = 's32[1]{0}', space=sflag, size = 0x4, scoped, tag = 'scoped memory for tpu_custom_call.1']
    #allocation7 [shape = 'u8[65536]{0}', space=vmem, size = 0x10000, scoped, tag = 'input window, operand 2, single buffered']
    #allocation8 [shape = 'u8[4096]{0}', space=vmem, size = 0x1000, scoped, tag = 'output window, operand 0, single buffered']
    %8 = vsyncpa [#allocation3], 0
    %9 = vsyncpa [#allocation6], 0
    %10 = vsyncpa [#allocation4], 0
    // Predicated region
    $region2: #{tpu_custom_call.1} parent=1 // pred_check
      _
    $region3: #{tpu_custom_call.1} parent=1 // pred_check_branch
      %12 = sbr.rel (0) target = $region5
    $region4: #{tpu_custom_call.1} parent=1 // pred_region
      %s14 = ssub.s32 128, 128
      %15 = vsyncadd [#allocation3], %s14
      %s17 = sshll.u32 [#allocation2], 4
      %s18 = int_to_ptr.vmem [resolvable:$true] %s17
      %20 = dma.hbm_to_vmem [thread:$0]  %s0, 128, %s18, [#allocation3]
    $region5: #{tpu_custom_call.1} parent=1 // pred_fallthru
      _
    // Predicated region
    $region6: #{tpu_custom_call.1} parent=1 // pred_check
      _
    $region7: #{tpu_custom_call.1} parent=1 // pred_check_branch
      %22 = sbr.rel (0) target = $region9
    $region8: #{tpu_custom_call.1} parent=1 // pred_region
      %s24 = ssub.s32 64, 64
      %25 = vsyncadd [#allocation6], %s24
      %s27 = sshll.u32 [#allocation5], 4
      %s28 = int_to_ptr.vmem [resolvable:$true] %s27
      %30 = dma.hbm_to_vmem [thread:$0]  %s1, 64, %s28, [#allocation6]
    $region9: #{tpu_custom_call.1} parent=1 // pred_fallthru
      _
    // Predicated region
    $region10: #{tpu_custom_call.1} parent=1 // pred_check
      _
    $region11: #{tpu_custom_call.1} parent=1 // pred_check_branch
      %32 = sbr.rel (0) target = $region13
    $region12: #{tpu_custom_call.1} parent=1 // pred_region
      %s34 = ssub.s32 2048, 2048
      %35 = vsyncadd [#allocation6], %s34
      %s36 = sshll.u32 [#allocation7], 4
      %s37 = int_to_ptr.vmem [resolvable:$true] %s36
      %42 = dma.hbm_to_vmem [thread:$0]  %s2, 2048, %s37, [#allocation6], 128, 128, 8
    $region13: #{tpu_custom_call.1} parent=1 // pred_fallthru
      _
    // Predicated region
    $region14: #{tpu_custom_call.1} parent=1 // pred_check
      _
    $region15: #{tpu_custom_call.1} parent=1 // pred_check_branch
      %44 = sbr.rel (0) target = $region17
    $region16: #{tpu_custom_call.1} parent=1 // pred_region
      %45 = dma.done [#allocation3], 128
    $region17: #{tpu_custom_call.1} parent=1 // pred_fallthru
      _
    // Predicated region
    $region18: #{tpu_custom_call.1} parent=1 // pred_check
      _
    $region19: #{tpu_custom_call.1} parent=1 // pred_check_branch
      %47 = sbr.rel (0) target = $region21
    $region20: #{tpu_custom_call.1} parent=1 // pred_region
      %48 = dma.done [#allocation6], 64
    $region21: #{tpu_custom_call.1} parent=1 // pred_fallthru
      _
    // Predicated region
    $region22: #{tpu_custom_call.1} parent=1 // pred_check
      _
    $region23: #{tpu_custom_call.1} parent=1 // pred_check_branch
      %50 = sbr.rel (0) target = $region25
    $region24: #{tpu_custom_call.1} parent=1 // pred_region
      %51 = dma.done [#allocation6], 2048
    $region25: #{tpu_custom_call.1} parent=1 // pred_fallthru
      _
    %v52 = vld [vmem:[#allocation7] sm:$0xff]
    %v53 = vld [vmem:[#allocation7 + $0x8] sm:$0xff]
    %v54 = vld [vmem:[#allocation7 + $0x10] sm:$0xff]
    %v55 = vld [vmem:[#allocation7 + $0x18] sm:$0xff]
    %v56 = vld [vmem:[#allocation7 + $0x20] sm:$0xff]
    %v57 = vld [vmem:[#allocation7 + $0x28] sm:$0xff]
    %v58 = vld [vmem:[#allocation7 + $0x30] sm:$0xff]
    %v59 = vld [vmem:[#allocation7 + $0x38] sm:$0xff]
    %v60 = vld [vmem:[#allocation7 + $0x40] sm:$0xff]
    %v61 = vld [vmem:[#allocation7 + $0x48] sm:$0xff]
    %v62 = vld [vmem:[#allocation7 + $0x50] sm:$0xff]
    %v63 = vld [vmem:[#allocation7 + $0x58] sm:$0xff]
    %v64 = vld [vmem:[#allocation7 + $0x60] sm:$0xff]
    %v65 = vld [vmem:[#allocation7 + $0x68] sm:$0xff]
    %v66 = vld [vmem:[#allocation7 + $0x70] sm:$0xff]
    %v67 = vld [vmem:[#allocation7 + $0x78] sm:$0xff]
    %v68 = vld [vmem:[#allocation5] sm:$0xf]
    %v69 = vlaneseq
    %v70 = vshrl.u32 %v69, 7
    %v71 = vsub.s32 0, %v70
    %v72 = vrot.slane %v68, %v71
    %v73 = vlaneseq
    %v74 = vshrl.u32 %v73, 7
    %v75 = vsub.s32 1, %v74
    %v76 = vrot.slane %v68, %v75
    %v77 = vlaneseq
    %v78 = vshrl.u32 %v77, 7
    %v79 = vsub.s32 2, %v78
    %v80 = vrot.slane %v68, %v79
    %v81 = vlaneseq
    %v82 = vshrl.u32 %v81, 7
    %v83 = vsub.s32 3, %v82
    %v84 = vrot.slane %v68, %v83
    %v85 = vld [vmem:[#allocation2] sm:$0xff]
    %86 = vmatprep.subr.mxu0 0.0
    %v87 = vand.u32 %v52, 4294901760
    %88 = vmatpush1.msra.mxu0 %v87
    %89 = vmatprep.subr.mxu0 0.0
    %v90 = vand.u32 %v53, 4294901760
    %91 = vmatpush1.msra.mxu0 %v90
    %92 = vmatprep.subr.mxu0 0.0
    %v93 = vand.u32 %v54, 4294901760
    %94 = vmatpush1.msra.mxu0 %v93
    %95 = vmatprep.subr.mxu0 0.0
    %v96 = vand.u32 %v55, 4294901760
    %97 = vmatpush1.msra.mxu0 %v96
    %98 = vmatprep.subr.mxu0 0.0
    %v99 = vand.u32 %v56, 4294901760
    %100 = vmatpush1.msra.mxu0 %v99
    %101 = vmatprep.subr.mxu0 0.0
    %v102 = vand.u32 %v57, 4294901760
    %103 = vmatpush1.msra.mxu0 %v102
    %104 = vmatprep.subr.mxu0 0.0
    %v105 = vand.u32 %v58, 4294901760
    %106 = vmatpush1.msra.mxu0 %v105
    %107 = vmatprep.subr.mxu0 0.0
    %v108 = vand.u32 %v59, 4294901760
    %109 = vmatpush1.msra.mxu0 %v108
    %110 = vmatprep.subr.mxu0 0.0
    %v111 = vand.u32 %v60, 4294901760
    %112 = vmatpush1.msra.mxu0 %v111
    %113 = vmatprep.subr.mxu0 0.0
    %v114 = vand.u32 %v61, 4294901760
    %115 = vmatpush1.msra.mxu0 %v114
    %116 = vmatprep.subr.mxu0 0.0
    %v117 = vand.u32 %v62, 4294901760
    %118 = vmatpush1.msra.mxu0 %v117
    %119 = vmatprep.subr.mxu0 0.0
    %v120 = vand.u32 %v63, 4294901760
    %121 = vmatpush1.msra.mxu0 %v120
    %122 = vmatprep.subr.mxu0 0.0
    %v123 = vand.u32 %v64, 4294901760
    %124 = vmatpush1.msra.mxu0 %v123
    %125 = vmatprep.subr.mxu0 0.0
    %v126 = vand.u32 %v65, 4294901760
    %127 = vmatpush1.msra.mxu0 %v126
    %128 = vmatprep.subr.mxu0 0.0
    %v129 = vand.u32 %v66, 4294901760
    %130 = vmatpush1.msra.mxu0 %v129
    %131 = vmatprep.subr.mxu0 0.0
    %v132 = vand.u32 %v67, 4294901760
    %133 = vmatpush1.msra.mxu0 %v132
    %134 = vmatprep.subr.mxu0 0.0
    %135 = vmatpush1.msra.mxu0 0.0
    %136 = vmatprep.subr.mxu0 0.0
    %137 = vmatpush1.msra.mxu0 0.0
    %138 = vmatprep.subr.mxu0 0.0
    %139 = vmatpush1.msra.mxu0 0.0
    %140 = vmatprep.subr.mxu0 0.0
    %141 = vmatpush1.msra.mxu0 0.0
    %142 = vmatprep.subr.mxu0 0.0
    %143 = vmatpush1.msra.mxu0 0.0
    %144 = vmatprep.subr.mxu0 0.0
    %145 = vmatpush1.msra.mxu0 0.0
    %146 = vmatprep.subr.mxu0 0.0
    %147 = vmatpush1.msra.mxu0 0.0
    %148 = vmatprep.subr.mxu0 0.0
    %149 = vmatpush1.msra.mxu0 0.0
    %150 = vmatprep.subr.mxu0 0.0
    %151 = vmatpush1.msra.mxu0 0.0
    %152 = vmatprep.subr.mxu0 0.0
    %153 = vmatpush1.msra.mxu0 0.0
    %154 = vmatprep.subr.mxu0 0.0
    %155 = vmatpush1.msra.mxu0 0.0
    %156 = vmatprep.subr.mxu0 0.0
    %157 = vmatpush1.msra.mxu0 0.0
    %158 = vmatprep.subr.mxu0 0.0
    %159 = vmatpush1.msra.mxu0 0.0
    %160 = vmatprep.subr.mxu0 0.0
    %161 = vmatpush1.msra.mxu0 0.0
    %162 = vmatprep.subr.mxu0 0.0
    %163 = vmatpush1.msra.mxu0 0.0
    %164 = vmatprep.subr.mxu0 0.0
    %165 = vmatpush1.msra.mxu0 0.0
    %166 = vmatprep.mubr.f32.mxu0 0.0
    %v167 = vand.u32 %v85, 4294901760
    %v168 = vsub.f32 %v85, %v167
    %v169 = vand.u32 %v168, 4294901760
    %v170 = vsub.f32 %v168, %v169
    %v171 = vand.u32 %v170, 4294901760
    %172 = vmatmul.mubr.f32.gmra.mrb[0].mxu0 %v171
    %v173 = vpop.f32.mrb[0].mxu0
    %v174 = vadd.f32 0.0, %v173
    %v175 = vpop.f32.mrb[0].mxu0
    %176 = vdwg.mxu0
    %177 = vmatprep.subr.mxu0 0.0
    %v178 = vand.u32 %v52, 4294901760
    %v179 = vsub.f32 %v52, %v178
    %v180 = vand.u32 %v179, 4294901760
    %v181 = vsub.f32 %v179, %v180
    %v182 = vand.u32 %v181, 4294901760
    %183 = vmatpush1.msra.mxu0 %v182
    %184 = vmatprep.subr.mxu0 0.0
    %v185 = vand.u32 %v53, 4294901760
    %v186 = vsub.f32 %v53, %v185
    %v187 = vand.u32 %v186, 4294901760
    %v188 = vsub.f32 %v186, %v187
    %v189 = vand.u32 %v188, 4294901760
    %190 = vmatpush1.msra.mxu0 %v189
    %191 = vmatprep.subr.mxu0 0.0
    %v192 = vand.u32 %v54, 4294901760
    %v193 = vsub.f32 %v54, %v192
    %v194 = vand.u32 %v193, 4294901760
    %v195 = vsub.f32 %v193, %v194
    %v196 = vand.u32 %v195, 4294901760
    %197 = vmatpush1.msra.mxu0 %v196
    %198 = vmatprep.subr.mxu0 0.0
    %v199 = vand.u32 %v55, 4294901760
    %v200 = vsub.f32 %v55, %v199
    %v201 = vand.u32 %v200, 4294901760
    %v202 = vsub.f32 %v200, %v201
    %v203 = vand.u32 %v202, 4294901760
    %204 = vmatpush1.msra.mxu0 %v203
    %205 = vmatprep.subr.mxu0 0.0
    %v206 = vand.u32 %v56, 4294901760
    %v207 = vsub.f32 %v56, %v206
    %v208 = vand.u32 %v207, 4294901760
    %v209 = vsub.f32 %v207, %v208
    %v210 = vand.u32 %v209, 4294901760
    %211 = vmatpush1.msra.mxu0 %v210
    %212 = vmatprep.subr.mxu0 0.0
    %v213 = vand.u32 %v57, 4294901760
    %v214 = vsub.f32 %v57, %v213
    %v215 = vand.u32 %v214, 4294901760
    %v216 = vsub.f32 %v214, %v215
    %v217 = vand.u32 %v216, 4294901760
    %218 = vmatpush1.msra.mxu0 %v217
    %219 = vmatprep.subr.mxu0 0.0
    %v220 = vand.u32 %v58, 4294901760
    %v221 = vsub.f32 %v58, %v220
    %v222 = vand.u32 %v221, 4294901760
    %v223 = vsub.f32 %v221, %v222
    %v224 = vand.u32 %v223, 4294901760
    %225 = vmatpush1.msra.mxu0 %v224
    %226 = vmatprep.subr.mxu0 0.0
    %v227 = vand.u32 %v59, 4294901760
    %v228 = vsub.f32 %v59, %v227
    %v229 = vand.u32 %v228, 4294901760
    %v230 = vsub.f32 %v228, %v229
    %v231 = vand.u32 %v230, 4294901760
    %232 = vmatpush1.msra.mxu0 %v231
    %233 = vmatprep.subr.mxu0 0.0
    %v234 = vand.u32 %v60, 4294901760
    %v235 = vsub.f32 %v60, %v234
    %v236 = vand.u32 %v235, 4294901760
    %v237 = vsub.f32 %v235, %v236
    %v238 = vand.u32 %v237, 4294901760
    %239 = vmatpush1.msra.mxu0 %v238
    %240 = vmatprep.subr.mxu0 0.0
    %v241 = vand.u32 %v61, 4294901760
    %v242 = vsub.f32 %v61, %v241
    %v243 = vand.u32 %v242, 4294901760
    %v244 = vsub.f32 %v242, %v243
    %v245 = vand.u32 %v244, 4294901760
    %246 = vmatpush1.msra.mxu0 %v245
    %247 = vmatprep.subr.mxu0 0.0
    %v248 = vand.u32 %v62, 4294901760
    %v249 = vsub.f32 %v62, %v248
    %v250 = vand.u32 %v249, 4294901760
    %v251 = vsub.f32 %v249, %v250
    %v252 = vand.u32 %v251, 4294901760
    %253 = vmatpush1.msra.mxu0 %v252
    %254 = vmatprep.subr.mxu0 0.0
    %v255 = vand.u32 %v63, 4294901760
    %v256 = vsub.f32 %v63, %v255
    %v257 = vand.u32 %v256, 4294901760
    %v258 = vsub.f32 %v256, %v257
    %v259 = vand.u32 %v258, 4294901760
    %260 = vmatpush1.msra.mxu0 %v259
    %261 = vmatprep.subr.mxu0 0.0
    %v262 = vand.u32 %v64, 4294901760
    %v263 = vsub.f32 %v64, %v262
    %v264 = vand.u32 %v263, 4294901760
    %v265 = vsub.f32 %v263, %v264
    %v266 = vand.u32 %v265, 4294901760
    %267 = vmatpush1.msra.mxu0 %v266
    %268 = vmatprep.subr.mxu0 0.0
    %v269 = vand.u32 %v65, 4294901760
    %v270 = vsub.f32 %v65, %v269
    %v271 = vand.u32 %v270, 4294901760
    %v272 = vsub.f32 %v270, %v271
    %v273 = vand.u32 %v272, 4294901760
    %274 = vmatpush1.msra.mxu0 %v273
    %275 = vmatprep.subr.mxu0 0.0
    %v276 = vand.u32 %v66, 4294901760
    %v277 = vsub.f32 %v66, %v276
    %v278 = vand.u32 %v277, 4294901760
    %v279 = vsub.f32 %v277, %v278
    %v280 = vand.u32 %v279, 4294901760
    %281 = vmatpush1.msra.mxu0 %v280
    %282 = vmatprep.subr.mxu0 0.0
    %v283 = vand.u32 %v67, 4294901760
    %v284 = vsub.f32 %v67, %v283
    %v285 = vand.u32 %v284, 4294901760
    %v286 = vsub.f32 %v284, %v285
    %v287 = vand.u32 %v286, 4294901760
    %288 = vmatpush1.msra.mxu0 %v287
    %289 = vmatprep.subr.mxu0 0.0
    %290 = vmatpush1.msra.mxu0 0.0
    %291 = vmatprep.subr.mxu0 0.0
    %292 = vmatpush1.msra.mxu0 0.0
    %293 = vmatprep.subr.mxu0 0.0
    %294 = vmatpush1.msra.mxu0 0.0
    %295 = vmatprep.subr.mxu0 0.0
    %296 = vmatpush1.msra.mxu0 0.0
    %297 = vmatprep.subr.mxu0 0.0
    %298 = vmatpush1.msra.mxu0 0.0
    %299 = vmatprep.subr.mxu0 0.0
    %300 = vmatpush1.msra.mxu0 0.0
    %301 = vmatprep.subr.mxu0 0.0
    %302 = vmatpush1.msra.mxu0 0.0
    %303 = vmatprep.subr.mxu0 0.0
    %304 = vmatpush1.msra.mxu0 0.0
    %305 = vmatprep.subr.mxu0 0.0
    %306 = vmatpush1.msra.mxu0 0.0
    %307 = vmatprep.subr.mxu0 0.0
    %308 = vmatpush1.msra.mxu0 0.0
    %309 = vmatprep.subr.mxu0 0.0
    %310 = vmatpush1.msra.mxu0 0.0
    %311 = vmatprep.subr.mxu0 0.0
    %312 = vmatpush1.msra.mxu0 0.0
    %313 = vmatprep.subr.mxu0 0.0
    %314 = vmatpush1.msra.mxu0 0.0
    %315 = vmatprep.subr.mxu0 0.0
    %316 = vmatpush1.msra.mxu0 0.0
    %317 = vmatprep.subr.mxu0 0.0
    %318 = vmatpush1.msra.mxu0 0.0
    %319 = vmatprep.subr.mxu0 0.0
    %320 = vmatpush1.msra.mxu0 0.0
    %321 = vmatprep.mubr.f32.mxu0 0.0
    %v322 = vand.u32 %v85, 4294901760
    %323 = vmatmul.mubr.f32.gmra.mrb[0].mxu0 %v322
    %v324 = vpop.f32.mrb[0].mxu0
    %v325 = vadd.f32 %v174, %v324
    %v326 = vpop.f32.mrb[0].mxu0
    %327 = vdwg.mxu0
    %328 = vmatprep.subr.mxu0 0.0
    %v329 = vand.u32 %v52, 4294901760
    %v330 = vsub.f32 %v52, %v329
    %331 = vmatpush1.msra.mxu0 %v330
    %332 = vmatprep.subr.mxu0 0.0
    %v333 = vand.u32 %v53, 4294901760
    %v334 = vsub.f32 %v53, %v333
    %335 = vmatpush1.msra.mxu0 %v334
    %336 = vmatprep.subr.mxu0 0.0
    %v337 = vand.u32 %v54, 4294901760
    %v338 = vsub.f32 %v54, %v337
    %339 = vmatpush1.msra.mxu0 %v338
    %340 = vmatprep.subr.mxu0 0.0
    %v341 = vand.u32 %v55, 4294901760
    %v342 = vsub.f32 %v55, %v341
    %343 = vmatpush1.msra.mxu0 %v342
    %344 = vmatprep.subr.mxu0 0.0
    %v345 = vand.u32 %v56, 4294901760
    %v346 = vsub.f32 %v56, %v345
    %347 = vmatpush1.msra.mxu0 %v346
    %348 = vmatprep.subr.mxu0 0.0
    %v349 = vand.u32 %v57, 4294901760
    %v350 = vsub.f32 %v57, %v349
    %351 = vmatpush1.msra.mxu0 %v350
    %352 = vmatprep.subr.mxu0 0.0
    %v353 = vand.u32 %v58, 4294901760
    %v354 = vsub.f32 %v58, %v353
    %355 = vmatpush1.msra.mxu0 %v354
    %356 = vmatprep.subr.mxu0 0.0
    %v357 = vand.u32 %v59, 4294901760
    %v358 = vsub.f32 %v59, %v357
    %359 = vmatpush1.msra.mxu0 %v358
    %360 = vmatprep.subr.mxu0 0.0
    %v361 = vand.u32 %v60, 4294901760
    %v362 = vsub.f32 %v60, %v361
    %363 = vmatpush1.msra.mxu0 %v362
    %364 = vmatprep.subr.mxu0 0.0
    %v365 = vand.u32 %v61, 4294901760
    %v366 = vsub.f32 %v61, %v365
    %367 = vmatpush1.msra.mxu0 %v366
    %368 = vmatprep.subr.mxu0 0.0
    %v369 = vand.u32 %v62, 4294901760
    %v370 = vsub.f32 %v62, %v369
    %371 = vmatpush1.msra.mxu0 %v370
    %372 = vmatprep.subr.mxu0 0.0
    %v373 = vand.u32 %v63, 4294901760
    %v374 = vsub.f32 %v63, %v373
    %375 = vmatpush1.msra.mxu0 %v374
    %376 = vmatprep.subr.mxu0 0.0
    %v377 = vand.u32 %v64, 4294901760
    %v378 = vsub.f32 %v64, %v377
    %379 = vmatpush1.msra.mxu0 %v378
    %380 = vmatprep.subr.mxu0 0.0
    %v381 = vand.u32 %v65, 4294901760
    %v382 = vsub.f32 %v65, %v381
    %383 = vmatpush1.msra.mxu0 %v382
    %384 = vmatprep.subr.mxu0 0.0
    %v385 = vand.u32 %v66, 4294901760
    %v386 = vsub.f32 %v66, %v385
    %387 = vmatpush1.msra.mxu0 %v386
    %388 = vmatprep.subr.mxu0 0.0
    %v389 = vand.u32 %v67, 4294901760
    %v390 = vsub.f32 %v67, %v389
    %391 = vmatpush1.msra.mxu0 %v390
    %392 = vmatprep.subr.mxu0 0.0
    %393 = vmatpush1.msra.mxu0 0.0
    %394 = vmatprep.subr.mxu0 0.0
    %395 = vmatpush1.msra.mxu0 0.0
    %396 = vmatprep.subr.mxu0 0.0
    %397 = vmatpush1.msra.mxu0 0.0
    %398 = vmatprep.subr.mxu0 0.0
    %399 = vmatpush1.msra.mxu0 0.0
    %400 = vmatprep.subr.mxu0 0.0
    %401 = vmatpush1.msra.mxu0 0.0
    %402 = vmatprep.subr.mxu0 0.0
    %403 = vmatpush1.msra.mxu0 0.0
    %404 = vmatprep.subr.mxu0 0.0
    %405 = vmatpush1.msra.mxu0 0.0
    %406 = vmatprep.subr.mxu0 0.0
    %407 = vmatpush1.msra.mxu0 0.0
    %408 = vmatprep.subr.mxu0 0.0
    %409 = vmatpush1.msra.mxu0 0.0
    %410 = vmatprep.subr.mxu0 0.0
    %411 = vmatpush1.msra.mxu0 0.0
    %412 = vmatprep.subr.mxu0 0.0
    %413 = vmatpush1.msra.mxu0 0.0
    %414 = vmatprep.subr.mxu0 0.0
    %415 = vmatpush1.msra.mxu0 0.0
    %416 = vmatprep.subr.mxu0 0.0
    %417 = vmatpush1.msra.mxu0 0.0
    %418 = vmatprep.subr.mxu0 0.0
    %419 = vmatpush1.msra.mxu0 0.0
    %420 = vmatprep.subr.mxu0 0.0
    %421 = vmatpush1.msra.mxu0 0.0
    %422 = vmatprep.subr.mxu0 0.0
    %423 = vmatpush1.msra.mxu0 0.0
    %424 = vmatprep.mubr.f32.mxu0 0.0
    %v425 = vand.u32 %v85, 4294901760
    %v426 = vsub.f32 %v85, %v425
    %427 = vmatmul.mubr.f32.gmra.mrb[0].mxu0 %v426
    %v428 = vpop.f32.mrb[0].mxu0
    %v429 = vadd.f32 %v325, %v428
    %v430 = vpop.f32.mrb[0].mxu0
    %431 = vdwg.mxu0
    %432 = vmatprep.subr.mxu0 0.0
    %v433 = vand.u32 %v52, 4294901760
    %434 = vmatpush1.msra.mxu0 %v433
    %435 = vmatprep.subr.mxu0 0.0
    %v436 = vand.u32 %v53, 4294901760
    %437 = vmatpush1.msra.mxu0 %v436
    %438 = vmatprep.subr.mxu0 0.0
    %v439 = vand.u32 %v54, 4294901760
    %440 = vmatpush1.msra.mxu0 %v439
    %441 = vmatprep.subr.mxu0 0.0
    %v442 = vand.u32 %v55, 4294901760
    %443 = vmatpush1.msra.mxu0 %v442
    %444 = vmatprep.subr.mxu0 0.0
    %v445 = vand.u32 %v56, 4294901760
    %446 = vmatpush1.msra.mxu0 %v445
    %447 = vmatprep.subr.mxu0 0.0
    %v448 = vand.u32 %v57, 4294901760
    %449 = vmatpush1.msra.mxu0 %v448
    %450 = vmatprep.subr.mxu0 0.0
    %v451 = vand.u32 %v58, 4294901760
    %452 = vmatpush1.msra.mxu0 %v451
    %453 = vmatprep.subr.mxu0 0.0
    %v454 = vand.u32 %v59, 4294901760
    %455 = vmatpush1.msra.mxu0 %v454
    %456 = vmatprep.subr.mxu0 0.0
    %v457 = vand.u32 %v60, 4294901760
    %458 = vmatpush1.msra.mxu0 %v457
    %459 = vmatprep.subr.mxu0 0.0
    %v460 = vand.u32 %v61, 4294901760
    %461 = vmatpush1.msra.mxu0 %v460
    %462 = vmatprep.subr.mxu0 0.0
    %v463 = vand.u32 %v62, 4294901760
    %464 = vmatpush1.msra.mxu0 %v463
    %465 = vmatprep.subr.mxu0 0.0
    %v466 = vand.u32 %v63, 4294901760
    %467 = vmatpush1.msra.mxu0 %v466
    %468 = vmatprep.subr.mxu0 0.0
    %v469 = vand.u32 %v64, 4294901760
    %470 = vmatpush1.msra.mxu0 %v469
    %471 = vmatprep.subr.mxu0 0.0
    %v472 = vand.u32 %v65, 4294901760
    %473 = vmatpush1.msra.mxu0 %v472
    %474 = vmatprep.subr.mxu0 0.0
    %v475 = vand.u32 %v66, 4294901760
    %476 = vmatpush1.msra.mxu0 %v475
    %477 = vmatprep.subr.mxu0 0.0
    %v478 = vand.u32 %v67, 4294901760
    %479 = vmatpush1.msra.mxu0 %v478
    %480 = vmatprep.subr.mxu0 0.0
    %481 = vmatpush1.msra.mxu0 0.0
    %482 = vmatprep.subr.mxu0 0.0
    %483 = vmatpush1.msra.mxu0 0.0
    %484 = vmatprep.subr.mxu0 0.0
    %485 = vmatpush1.msra.mxu0 0.0
    %486 = vmatprep.subr.mxu0 0.0
    %487 = vmatpush1.msra.mxu0 0.0
    %488 = vmatprep.subr.mxu0 0.0
    %489 = vmatpush1.msra.mxu0 0.0
    %490 = vmatprep.subr.mxu0 0.0
    %491 = vmatpush1.msra.mxu0 0.0
    %492 = vmatprep.subr.mxu0 0.0
    %493 = vmatpush1.msra.mxu0 0.0
    %494 = vmatprep.subr.mxu0 0.0
    %495 = vmatpush1.msra.mxu0 0.0
    %496 = vmatprep.subr.mxu0 0.0
    %497 = vmatpush1.msra.mxu0 0.0
    %498 = vmatprep.subr.mxu0 0.0
    %499 = vmatpush1.msra.mxu0 0.0
    %500 = vmatprep.subr.mxu0 0.0
    %501 = vmatpush1.msra.mxu0 0.0
    %502 = vmatprep.subr.mxu0 0.0
    %503 = vmatpush1.msra.mxu0 0.0
    %504 = vmatprep.subr.mxu0 0.0
    %505 = vmatpush1.msra.mxu0 0.0
    %506 = vmatprep.subr.mxu0 0.0
    %507 = vmatpush1.msra.mxu0 0.0
    %508 = vmatprep.subr.mxu0 0.0
    %509 = vmatpush1.msra.mxu0 0.0
    %510 = vmatprep.subr.mxu0 0.0
    %511 = vmatpush1.msra.mxu0 0.0
    %512 = vmatprep.mubr.f32.mxu0 0.0
    %v513 = vand.u32 %v85, 4294901760
    %v514 = vsub.f32 %v85, %v513
    %v515 = vand.u32 %v514, 4294901760
    %516 = vmatmul.mubr.f32.gmra.mrb[0].mxu0 %v515
    %v517 = vpop.f32.mrb[0].mxu0
    %v518 = vadd.f32 %v429, %v517
    %v519 = vpop.f32.mrb[0].mxu0
    %520 = vdwg.mxu0
    %521 = vmatprep.subr.mxu0 0.0
    %v522 = vand.u32 %v52, 4294901760
    %v523 = vsub.f32 %v52, %v522
    %v524 = vand.u32 %v523, 4294901760
    %525 = vmatpush1.msra.mxu0 %v524
    %526 = vmatprep.subr.mxu0 0.0
    %v527 = vand.u32 %v53, 4294901760
    %v528 = vsub.f32 %v53, %v527
    %v529 = vand.u32 %v528, 4294901760
    %530 = vmatpush1.msra.mxu0 %v529
    %531 = vmatprep.subr.mxu0 0.0
    %v532 = vand.u32 %v54, 4294901760
    %v533 = vsub.f32 %v54, %v532
    %v534 = vand.u32 %v533, 4294901760
    %535 = vmatpush1.msra.mxu0 %v534
    %536 = vmatprep.subr.mxu0 0.0
    %v537 = vand.u32 %v55, 4294901760
    %v538 = vsub.f32 %v55, %v537
    %v539 = vand.u32 %v538, 4294901760
    %540 = vmatpush1.msra.mxu0 %v539
    %541 = vmatprep.subr.mxu0 0.0
    %v542 = vand.u32 %v56, 4294901760
    %v543 = vsub.f32 %v56, %v542
    %v544 = vand.u32 %v543, 4294901760
    %545 = vmatpush1.msra.mxu0 %v544
    %546 = vmatprep.subr.mxu0 0.0
    %v547 = vand.u32 %v57, 4294901760
    %v548 = vsub.f32 %v57, %v547
    %v549 = vand.u32 %v548, 4294901760
    %550 = vmatpush1.msra.mxu0 %v549
    %551 = vmatprep.subr.mxu0 0.0
    %v552 = vand.u32 %v58, 4294901760
    %v553 = vsub.f32 %v58, %v552
    %v554 = vand.u32 %v553, 4294901760
    %555 = vmatpush1.msra.mxu0 %v554
    %556 = vmatprep.subr.mxu0 0.0
    %v557 = vand.u32 %v59, 4294901760
    %v558 = vsub.f32 %v59, %v557
    %v559 = vand.u32 %v558, 4294901760
    %560 = vmatpush1.msra.mxu0 %v559
    %561 = vmatprep.subr.mxu0 0.0
    %v562 = vand.u32 %v60, 4294901760
    %v563 = vsub.f32 %v60, %v562
    %v564 = vand.u32 %v563, 4294901760
    %565 = vmatpush1.msra.mxu0 %v564
    %566 = vmatprep.subr.mxu0 0.0
    %v567 = vand.u32 %v61, 4294901760
    %v568 = vsub.f32 %v61, %v567
    %v569 = vand.u32 %v568, 4294901760
    %570 = vmatpush1.msra.mxu0 %v569
    %571 = vmatprep.subr.mxu0 0.0
    %v572 = vand.u32 %v62, 4294901760
    %v573 = vsub.f32 %v62, %v572
    %v574 = vand.u32 %v573, 4294901760
    %575 = vmatpush1.msra.mxu0 %v574
    %576 = vmatprep.subr.mxu0 0.0
    %v577 = vand.u32 %v63, 4294901760
    %v578 = vsub.f32 %v63, %v577
    %v579 = vand.u32 %v578, 4294901760
    %580 = vmatpush1.msra.mxu0 %v579
    %581 = vmatprep.subr.mxu0 0.0
    %v582 = vand.u32 %v64, 4294901760
    %v583 = vsub.f32 %v64, %v582
    %v584 = vand.u32 %v583, 4294901760
    %585 = vmatpush1.msra.mxu0 %v584
    %586 = vmatprep.subr.mxu0 0.0
    %v587 = vand.u32 %v65, 4294901760
    %v588 = vsub.f32 %v65, %v587
    %v589 = vand.u32 %v588, 4294901760
    %590 = vmatpush1.msra.mxu0 %v589
    %591 = vmatprep.subr.mxu0 0.0
    %v592 = vand.u32 %v66, 4294901760
    %v593 = vsub.f32 %v66, %v592
    %v594 = vand.u32 %v593, 4294901760
    %595 = vmatpush1.msra.mxu0 %v594
    %596 = vmatprep.subr.mxu0 0.0
    %v597 = vand.u32 %v67, 4294901760
    %v598 = vsub.f32 %v67, %v597
    %v599 = vand.u32 %v598, 4294901760
    %600 = vmatpush1.msra.mxu0 %v599
    %601 = vmatprep.subr.mxu0 0.0
    %602 = vmatpush1.msra.mxu0 0.0
    %603 = vmatprep.subr.mxu0 0.0
    %604 = vmatpush1.msra.mxu0 0.0
    %605 = vmatprep.subr.mxu0 0.0
    %606 = vmatpush1.msra.mxu0 0.0
    %607 = vmatprep.subr.mxu0 0.0
    %608 = vmatpush1.msra.mxu0 0.0
    %609 = vmatprep.subr.mxu0 0.0
    %610 = vmatpush1.msra.mxu0 0.0
    %611 = vmatprep.subr.mxu0 0.0
    %612 = vmatpush1.msra.mxu0 0.0
    %613 = vmatprep.subr.mxu0 0.0
    %614 = vmatpush1.msra.mxu0 0.0
    %615 = vmatprep.subr.mxu0 0.0
    %616 = vmatpush1.msra.mxu0 0.0
    %617 = vmatprep.subr.mxu0 0.0
    %618 = vmatpush1.msra.mxu0 0.0
    %619 = vmatprep.subr.mxu0 0.0
    %620 = vmatpush1.msra.mxu0 0.0
    %621 = vmatprep.subr.mxu0 0.0
    %622 = vmatpush1.msra.mxu0 0.0
    %623 = vmatprep.subr.mxu0 0.0
    %624 = vmatpush1.msra.mxu0 0.0
    %625 = vmatprep.subr.mxu0 0.0
    %626 = vmatpush1.msra.mxu0 0.0
    %627 = vmatprep.subr.mxu0 0.0
    %628 = vmatpush1.msra.mxu0 0.0
    %629 = vmatprep.subr.mxu0 0.0
    %630 = vmatpush1.msra.mxu0 0.0
    %631 = vmatprep.subr.mxu0 0.0
    %632 = vmatpush1.msra.mxu0 0.0
    %633 = vmatprep.mubr.f32.mxu0 0.0
    %v634 = vand.u32 %v85, 4294901760
    %635 = vmatmul.mubr.f32.gmra.mrb[0].mxu0 %v634
    %v636 = vpop.f32.mrb[0].mxu0
    %v637 = vadd.f32 %v518, %v636
    %v638 = vpop.f32.mrb[0].mxu0
    %639 = vdwg.mxu0
    %640 = vmatprep.subr.mxu0 0.0
    %v641 = vand.u32 %v52, 4294901760
    %642 = vmatpush1.msra.mxu0 %v641
    %643 = vmatprep.subr.mxu0 0.0
    %v644 = vand.u32 %v53, 4294901760
    %645 = vmatpush1.msra.mxu0 %v644
    %646 = vmatprep.subr.mxu0 0.0
    %v647 = vand.u32 %v54, 4294901760
    %648 = vmatpush1.msra.mxu0 %v647
    %649 = vmatprep.subr.mxu0 0.0
    %v650 = vand.u32 %v55, 4294901760
    %651 = vmatpush1.msra.mxu0 %v650
    %652 = vmatprep.subr.mxu0 0.0
    %v653 = vand.u32 %v56, 4294901760
    %654 = vmatpush1.msra.mxu0 %v653
    %655 = vmatprep.subr.mxu0 0.0
    %v656 = vand.u32 %v57, 4294901760
    %657 = vmatpush1.msra.mxu0 %v656
    %658 = vmatprep.subr.mxu0 0.0
    %v659 = vand.u32 %v58, 4294901760
    %660 = vmatpush1.msra.mxu0 %v659
    %661 = vmatprep.subr.mxu0 0.0
    %v662 = vand.u32 %v59, 4294901760
    %663 = vmatpush1.msra.mxu0 %v662
    %664 = vmatprep.subr.mxu0 0.0
    %v665 = vand.u32 %v60, 4294901760
    %666 = vmatpush1.msra.mxu0 %v665
    %667 = vmatprep.subr.mxu0 0.0
    %v668 = vand.u32 %v61, 4294901760
    %669 = vmatpush1.msra.mxu0 %v668
    %670 = vmatprep.subr.mxu0 0.0
    %v671 = vand.u32 %v62, 4294901760
    %672 = vmatpush1.msra.mxu0 %v671
    %673 = vmatprep.subr.mxu0 0.0
    %v674 = vand.u32 %v63, 4294901760
    %675 = vmatpush1.msra.mxu0 %v674
    %676 = vmatprep.subr.mxu0 0.0
    %v677 = vand.u32 %v64, 4294901760
    %678 = vmatpush1.msra.mxu0 %v677
    %679 = vmatprep.subr.mxu0 0.0
    %v680 = vand.u32 %v65, 4294901760
    %681 = vmatpush1.msra.mxu0 %v680
    %682 = vmatprep.subr.mxu0 0.0
    %v683 = vand.u32 %v66, 4294901760
    %684 = vmatpush1.msra.mxu0 %v683
    %685 = vmatprep.subr.mxu0 0.0
    %v686 = vand.u32 %v67, 4294901760
    %687 = vmatpush1.msra.mxu0 %v686
    %688 = vmatprep.subr.mxu0 0.0
    %689 = vmatpush1.msra.mxu0 0.0
    %690 = vmatprep.subr.mxu0 0.0
    %691 = vmatpush1.msra.mxu0 0.0
    %692 = vmatprep.subr.mxu0 0.0
    %693 = vmatpush1.msra.mxu0 0.0
    %694 = vmatprep.subr.mxu0 0.0
    %695 = vmatpush1.msra.mxu0 0.0
    %696 = vmatprep.subr.mxu0 0.0
    %697 = vmatpush1.msra.mxu0 0.0
    %698 = vmatprep.subr.mxu0 0.0
    %699 = vmatpush1.msra.mxu0 0.0
    %700 = vmatprep.subr.mxu0 0.0
    %701 = vmatpush1.msra.mxu0 0.0
    %702 = vmatprep.subr.mxu0 0.0
    %703 = vmatpush1.msra.mxu0 0.0
    %704 = vmatprep.subr.mxu0 0.0
    %705 = vmatpush1.msra.mxu0 0.0
    %706 = vmatprep.subr.mxu0 0.0
    %707 = vmatpush1.msra.mxu0 0.0
    %708 = vmatprep.subr.mxu0 0.0
    %709 = vmatpush1.msra.mxu0 0.0
    %710 = vmatprep.subr.mxu0 0.0
    %711 = vmatpush1.msra.mxu0 0.0
    %712 = vmatprep.subr.mxu0 0.0
    %713 = vmatpush1.msra.mxu0 0.0
    %714 = vmatprep.subr.mxu0 0.0
    %715 = vmatpush1.msra.mxu0 0.0
    %716 = vmatprep.subr.mxu0 0.0
    %717 = vmatpush1.msra.mxu0 0.0
    %718 = vmatprep.subr.mxu0 0.0
    %719 = vmatpush1.msra.mxu0 0.0
    %720 = vmatprep.mubr.f32.mxu0 0.0
    %v721 = vand.u32 %v85, 4294901760
    %722 = vmatmul.mubr.f32.gmra.mrb[0].mxu0 %v721
    %v723 = vpop.f32.mrb[0].mxu0
    %v724 = vadd.f32 %v637, %v723
    %v725 = vpop.f32.mrb[0].mxu0
    %726 = vdwg.mxu0
    %v727 = vsub.f32 %v85, %v724
    %v728 = vmul.f32 %v727, %v727
    %729 = vmatprep.subr.mxu0 0.0
    %v730 = vand.u32 %v52, 4294901760
    %731 = vmatpush1.msra.mxu0 %v730
    %732 = vmatprep.subr.mxu0 0.0
    %v733 = vand.u32 %v53, 4294901760
    %734 = vmatpush1.msra.mxu0 %v733
    %735 = vmatprep.subr.mxu0 0.0
    %v736 = vand.u32 %v54, 4294901760
    %737 = vmatpush1.msra.mxu0 %v736
    %738 = vmatprep.subr.mxu0 0.0
    %v739 = vand.u32 %v55, 4294901760
    %740 = vmatpush1.msra.mxu0 %v739
    %741 = vmatprep.subr.mxu0 0.0
    %v742 = vand.u32 %v56, 4294901760
    %743 = vmatpush1.msra.mxu0 %v742
    %744 = vmatprep.subr.mxu0 0.0
    %v745 = vand.u32 %v57, 4294901760
    %746 = vmatpush1.msra.mxu0 %v745
    %747 = vmatprep.subr.mxu0 0.0
    %v748 = vand.u32 %v58, 4294901760
    %749 = vmatpush1.msra.mxu0 %v748
    %750 = vmatprep.subr.mxu0 0.0
    %v751 = vand.u32 %v59, 4294901760
    %752 = vmatpush1.msra.mxu0 %v751
    %753 = vmatprep.subr.mxu0 0.0
    %v754 = vand.u32 %v60, 4294901760
    %755 = vmatpush1.msra.mxu0 %v754
    %756 = vmatprep.subr.mxu0 0.0
    %v757 = vand.u32 %v61, 4294901760
    %758 = vmatpush1.msra.mxu0 %v757
    %759 = vmatprep.subr.mxu0 0.0
    %v760 = vand.u32 %v62, 4294901760
    %761 = vmatpush1.msra.mxu0 %v760
    %762 = vmatprep.subr.mxu0 0.0
    %v763 = vand.u32 %v63, 4294901760
    %764 = vmatpush1.msra.mxu0 %v763
    %765 = vmatprep.subr.mxu0 0.0
    %v766 = vand.u32 %v64, 4294901760
    %767 = vmatpush1.msra.mxu0 %v766
    %768 = vmatprep.subr.mxu0 0.0
    %v769 = vand.u32 %v65, 4294901760
    %770 = vmatpush1.msra.mxu0 %v769
    %771 = vmatprep.subr.mxu0 0.0
    %v772 = vand.u32 %v66, 4294901760
    %773 = vmatpush1.msra.mxu0 %v772
    %774 = vmatprep.subr.mxu0 0.0
    %v775 = vand.u32 %v67, 4294901760
    %776 = vmatpush1.msra.mxu0 %v775
    %777 = vmatprep.subr.mxu0 0.0
    %778 = vmatpush1.msra.mxu0 0.0
    %779 = vmatprep.subr.mxu0 0.0
    %780 = vmatpush1.msra.mxu0 0.0
    %781 = vmatprep.subr.mxu0 0.0
    %782 = vmatpush1.msra.mxu0 0.0
    %783 = vmatprep.subr.mxu0 0.0
    %784 = vmatpush1.msra.mxu0 0.0
    %785 = vmatprep.subr.mxu0 0.0
    %786 = vmatpush1.msra.mxu0 0.0
    %787 = vmatprep.subr.mxu0 0.0
    %788 = vmatpush1.msra.mxu0 0.0
    %789 = vmatprep.subr.mxu0 0.0
    %790 = vmatpush1.msra.mxu0 0.0
    %791 = vmatprep.subr.mxu0 0.0
    %792 = vmatpush1.msra.mxu0 0.0
    %793 = vmatprep.subr.mxu0 0.0
    %794 = vmatpush1.msra.mxu0 0.0
    %795 = vmatprep.subr.mxu0 0.0
    %796 = vmatpush1.msra.mxu0 0.0
    %797 = vmatprep.subr.mxu0 0.0
    %798 = vmatpush1.msra.mxu0 0.0
    %799 = vmatprep.subr.mxu0 0.0
    %800 = vmatpush1.msra.mxu0 0.0
    %801 = vmatprep.subr.mxu0 0.0
    %802 = vmatpush1.msra.mxu0 0.0
    %803 = vmatprep.subr.mxu0 0.0
    %804 = vmatpush1.msra.mxu0 0.0
    %805 = vmatprep.subr.mxu0 0.0
    %806 = vmatpush1.msra.mxu0 0.0
    %807 = vmatprep.subr.mxu0 0.0
    %808 = vmatpush1.msra.mxu0 0.0
    %809 = vmatprep.mubr.f32.mxu0 0.0
    %v810 = vand.u32 %v728, 4294901760
    %v811 = vsub.f32 %v728, %v810
    %v812 = vand.u32 %v811, 4294901760
    %v813 = vsub.f32 %v811, %v812
    %v814 = vand.u32 %v813, 4294901760
    %815 = vmatmul.mubr.f32.gmra.mrb[0].mxu0 %v814
    %v816 = vpop.f32.mrb[0].mxu0
    %v817 = vadd.f32 0.0, %v816
    %v818 = vpop.f32.mrb[0].mxu0
    %819 = vdwg.mxu0
    %820 = vmatprep.subr.mxu0 0.0
    %v821 = vand.u32 %v52, 4294901760
    %v822 = vsub.f32 %v52, %v821
    %v823 = vand.u32 %v822, 4294901760
    %v824 = vsub.f32 %v822, %v823
    %v825 = vand.u32 %v824, 4294901760
    %826 = vmatpush1.msra.mxu0 %v825
    %827 = vmatprep.subr.mxu0 0.0
    %v828 = vand.u32 %v53, 4294901760
    %v829 = vsub.f32 %v53, %v828
    %v830 = vand.u32 %v829, 4294901760
    %v831 = vsub.f32 %v829, %v830
    %v832 = vand.u32 %v831, 4294901760
    %833 = vmatpush1.msra.mxu0 %v832
    %834 = vmatprep.subr.mxu0 0.0
    %v835 = vand.u32 %v54, 4294901760
    %v836 = vsub.f32 %v54, %v835
    %v837 = vand.u32 %v836, 4294901760
    %v838 = vsub.f32 %v836, %v837
    %v839 = vand.u32 %v838, 4294901760
    %840 = vmatpush1.msra.mxu0 %v839
    %841 = vmatprep.subr.mxu0 0.0
    %v842 = vand.u32 %v55, 4294901760
    %v843 = vsub.f32 %v55, %v842
    %v844 = vand.u32 %v843, 4294901760
    %v845 = vsub.f32 %v843, %v844
    %v846 = vand.u32 %v845, 4294901760
    %847 = vmatpush1.msra.mxu0 %v846
    %848 = vmatprep.subr.mxu0 0.0
    %v849 = vand.u32 %v56, 4294901760
    %v850 = vsub.f32 %v56, %v849
    %v851 = vand.u32 %v850, 4294901760
    %v852 = vsub.f32 %v850, %v851
    %v853 = vand.u32 %v852, 4294901760
    %854 = vmatpush1.msra.mxu0 %v853
    %855 = vmatprep.subr.mxu0 0.0
    %v856 = vand.u32 %v57, 4294901760
    %v857 = vsub.f32 %v57, %v856
    %v858 = vand.u32 %v857, 4294901760
    %v859 = vsub.f32 %v857, %v858
    %v860 = vand.u32 %v859, 4294901760
    %861 = vmatpush1.msra.mxu0 %v860
    %862 = vmatprep.subr.mxu0 0.0
    %v863 = vand.u32 %v58, 4294901760
    %v864 = vsub.f32 %v58, %v863
    %v865 = vand.u32 %v864, 4294901760
    %v866 = vsub.f32 %v864, %v865
    %v867 = vand.u32 %v866, 4294901760
    %868 = vmatpush1.msra.mxu0 %v867
    %869 = vmatprep.subr.mxu0 0.0
    %v870 = vand.u32 %v59, 4294901760
    %v871 = vsub.f32 %v59, %v870
    %v872 = vand.u32 %v871, 4294901760
    %v873 = vsub.f32 %v871, %v872
    %v874 = vand.u32 %v873, 4294901760
    %875 = vmatpush1.msra.mxu0 %v874
    %876 = vmatprep.subr.mxu0 0.0
    %v877 = vand.u32 %v60, 4294901760
    %v878 = vsub.f32 %v60, %v877
    %v879 = vand.u32 %v878, 4294901760
    %v880 = vsub.f32 %v878, %v879
    %v881 = vand.u32 %v880, 4294901760
    %882 = vmatpush1.msra.mxu0 %v881
    %883 = vmatprep.subr.mxu0 0.0
    %v884 = vand.u32 %v61, 4294901760
    %v885 = vsub.f32 %v61, %v884
    %v886 = vand.u32 %v885, 4294901760
    %v887 = vsub.f32 %v885, %v886
    %v888 = vand.u32 %v887, 4294901760
    %889 = vmatpush1.msra.mxu0 %v888
    %890 = vmatprep.subr.mxu0 0.0
    %v891 = vand.u32 %v62, 4294901760
    %v892 = vsub.f32 %v62, %v891
    %v893 = vand.u32 %v892, 4294901760
    %v894 = vsub.f32 %v892, %v893
    %v895 = vand.u32 %v894, 4294901760
    %896 = vmatpush1.msra.mxu0 %v895
    %897 = vmatprep.subr.mxu0 0.0
    %v898 = vand.u32 %v63, 4294901760
    %v899 = vsub.f32 %v63, %v898
    %v900 = vand.u32 %v899, 4294901760
    %v901 = vsub.f32 %v899, %v900
    %v902 = vand.u32 %v901, 4294901760
    %903 = vmatpush1.msra.mxu0 %v902
    %904 = vmatprep.subr.mxu0 0.0
    %v905 = vand.u32 %v64, 4294901760
    %v906 = vsub.f32 %v64, %v905
    %v907 = vand.u32 %v906, 4294901760
    %v908 = vsub.f32 %v906, %v907
    %v909 = vand.u32 %v908, 4294901760
    %910 = vmatpush1.msra.mxu0 %v909
    %911 = vmatprep.subr.mxu0 0.0
    %v912 = vand.u32 %v65, 4294901760
    %v913 = vsub.f32 %v65, %v912
    %v914 = vand.u32 %v913, 4294901760
    %v915 = vsub.f32 %v913, %v914
    %v916 = vand.u32 %v915, 4294901760
    %917 = vmatpush1.msra.mxu0 %v916
    %918 = vmatprep.subr.mxu0 0.0
    %v919 = vand.u32 %v66, 4294901760
    %v920 = vsub.f32 %v66, %v919
    %v921 = vand.u32 %v920, 4294901760
    %v922 = vsub.f32 %v920, %v921
    %v923 = vand.u32 %v922, 4294901760
    %924 = vmatpush1.msra.mxu0 %v923
    %925 = vmatprep.subr.mxu0 0.0
    %v926 = vand.u32 %v67, 4294901760
    %v927 = vsub.f32 %v67, %v926
    %v928 = vand.u32 %v927, 4294901760
    %v929 = vsub.f32 %v927, %v928
    %v930 = vand.u32 %v929, 4294901760
    %931 = vmatpush1.msra.mxu0 %v930
    %932 = vmatprep.subr.mxu0 0.0
    %933 = vmatpush1.msra.mxu0 0.0
    %934 = vmatprep.subr.mxu0 0.0
    %935 = vmatpush1.msra.mxu0 0.0
    %936 = vmatprep.subr.mxu0 0.0
    %937 = vmatpush1.msra.mxu0 0.0
    %938 = vmatprep.subr.mxu0 0.0
    %939 = vmatpush1.msra.mxu0 0.0
    %940 = vmatprep.subr.mxu0 0.0
    %941 = vmatpush1.msra.mxu0 0.0
    %942 = vmatprep.subr.mxu0 0.0
    %943 = vmatpush1.msra.mxu0 0.0
    %944 = vmatprep.subr.mxu0 0.0
    %945 = vmatpush1.msra.mxu0 0.0
    %946 = vmatprep.subr.mxu0 0.0
    %947 = vmatpush1.msra.mxu0 0.0
    %948 = vmatprep.subr.mxu0 0.0
    %949 = vmatpush1.msra.mxu0 0.0
    %950 = vmatprep.subr.mxu0 0.0
    %951 = vmatpush1.msra.mxu0 0.0
    %952 = vmatprep.subr.mxu0 0.0
    %953 = vmatpush1.msra.mxu0 0.0
    %954 = vmatprep.subr.mxu0 0.0
    %955 = vmatpush1.msra.mxu0 0.0
    %956 = vmatprep.subr.mxu0 0.0
    %957 = vmatpush1.msra.mxu0 0.0
    %958 = vmatprep.subr.mxu0 0.0
    %959 = vmatpush1.msra.mxu0 0.0
    %960 = vmatprep.subr.mxu0 0.0
    %961 = vmatpush1.msra.mxu0 0.0
    %962 = vmatprep.subr.mxu0 0.0
    %963 = vmatpush1.msra.mxu0 0.0
    %964 = vmatprep.mubr.f32.mxu0 0.0
    %v965 = vand.u32 %v728, 4294901760
    %966 = vmatmul.mubr.f32.gmra.mrb[0].mxu0 %v965
    %v967 = vpop.f32.mrb[0].mxu0
    %v968 = vadd.f32 %v817, %v967
    %v969 = vpop.f32.mrb[0].mxu0
    %970 = vdwg.mxu0
    %971 = vmatprep.subr.mxu0 0.0
    %v972 = vand.u32 %v52, 4294901760
    %v973 = vsub.f32 %v52, %v972
    %974 = vmatpush1.msra.mxu0 %v973
    %975 = vmatprep.subr.mxu0 0.0
    %v976 = vand.u32 %v53, 4294901760
    %v977 = vsub.f32 %v53, %v976
    %978 = vmatpush1.msra.mxu0 %v977
    %979 = vmatprep.subr.mxu0 0.0
    %v980 = vand.u32 %v54, 4294901760
    %v981 = vsub.f32 %v54, %v980
    %982 = vmatpush1.msra.mxu0 %v981
    %983 = vmatprep.subr.mxu0 0.0
    %v984 = vand.u32 %v55, 4294901760
    %v985 = vsub.f32 %v55, %v984
    %986 = vmatpush1.msra.mxu0 %v985
    %987 = vmatprep.subr.mxu0 0.0
    %v988 = vand.u32 %v56, 4294901760
    %v989 = vsub.f32 %v56, %v988
    %990 = vmatpush1.msra.mxu0 %v989
    %991 = vmatprep.subr.mxu0 0.0
    %v992 = vand.u32 %v57, 4294901760
    %v993 = vsub.f32 %v57, %v992
    %994 = vmatpush1.msra.mxu0 %v993
    %995 = vmatprep.subr.mxu0 0.0
    %v996 = vand.u32 %v58, 4294901760
    %v997 = vsub.f32 %v58, %v996
    %998 = vmatpush1.msra.mxu0 %v997
    %999 = vmatprep.subr.mxu0 0.0
    %v1000 = vand.u32 %v59, 4294901760
    %v1001 = vsub.f32 %v59, %v1000
    %1002 = vmatpush1.msra.mxu0 %v1001
    %1003 = vmatprep.subr.mxu0 0.0
    %v1004 = vand.u32 %v60, 4294901760
    %v1005 = vsub.f32 %v60, %v1004
    %1006 = vmatpush1.msra.mxu0 %v1005
    %1007 = vmatprep.subr.mxu0 0.0
    %v1008 = vand.u32 %v61, 4294901760
    %v1009 = vsub.f32 %v61, %v1008
    %1010 = vmatpush1.msra.mxu0 %v1009
    %1011 = vmatprep.subr.mxu0 0.0
    %v1012 = vand.u32 %v62, 4294901760
    %v1013 = vsub.f32 %v62, %v1012
    %1014 = vmatpush1.msra.mxu0 %v1013
    %1015 = vmatprep.subr.mxu0 0.0
    %v1016 = vand.u32 %v63, 4294901760
    %v1017 = vsub.f32 %v63, %v1016
    %1018 = vmatpush1.msra.mxu0 %v1017
    %1019 = vmatprep.subr.mxu0 0.0
    %v1020 = vand.u32 %v64, 4294901760
    %v1021 = vsub.f32 %v64, %v1020
    %1022 = vmatpush1.msra.mxu0 %v1021
    %1023 = vmatprep.subr.mxu0 0.0
    %v1024 = vand.u32 %v65, 4294901760
    %v1025 = vsub.f32 %v65, %v1024
    %1026 = vmatpush1.msra.mxu0 %v1025
    %1027 = vmatprep.subr.mxu0 0.0
    %v1028 = vand.u32 %v66, 4294901760
    %v1029 = vsub.f32 %v66, %v1028
    %1030 = vmatpush1.msra.mxu0 %v1029
    %1031 = vmatprep.subr.mxu0 0.0
    %v1032 = vand.u32 %v67, 4294901760
    %v1033 = vsub.f32 %v67, %v1032
    %1034 = vmatpush1.msra.mxu0 %v1033
    %1035 = vmatprep.subr.mxu0 0.0
    %1036 = vmatpush1.msra.mxu0 0.0
    %1037 = vmatprep.subr.mxu0 0.0
    %1038 = vmatpush1.msra.mxu0 0.0
    %1039 = vmatprep.subr.mxu0 0.0
    %1040 = vmatpush1.msra.mxu0 0.0
    %1041 = vmatprep.subr.mxu0 0.0
    %1042 = vmatpush1.msra.mxu0 0.0
    %1043 = vmatprep.subr.mxu0 0.0
    %1044 = vmatpush1.msra.mxu0 0.0
    %1045 = vmatprep.subr.mxu0 0.0
    %1046 = vmatpush1.msra.mxu0 0.0
    %1047 = vmatprep.subr.mxu0 0.0
    %1048 = vmatpush1.msra.mxu0 0.0
    %1049 = vmatprep.subr.mxu0 0.0
    %1050 = vmatpush1.msra.mxu0 0.0
    %1051 = vmatprep.subr.mxu0 0.0
    %1052 = vmatpush1.msra.mxu0 0.0
    %1053 = vmatprep.subr.mxu0 0.0
    %1054 = vmatpush1.msra.mxu0 0.0
    %1055 = vmatprep.subr.mxu0 0.0
    %1056 = vmatpush1.msra.mxu0 0.0
    %1057 = vmatprep.subr.mxu0 0.0
    %1058 = vmatpush1.msra.mxu0 0.0
    %1059 = vmatprep.subr.mxu0 0.0
    %1060 = vmatpush1.msra.mxu0 0.0
    %1061 = vmatprep.subr.mxu0 0.0
    %1062 = vmatpush1.msra.mxu0 0.0
    %1063 = vmatprep.subr.mxu0 0.0
    %1064 = vmatpush1.msra.mxu0 0.0
    %1065 = vmatprep.subr.mxu0 0.0
    %1066 = vmatpush1.msra.mxu0 0.0
    %1067 = vmatprep.mubr.f32.mxu0 0.0
    %v1068 = vand.u32 %v728, 4294901760
    %v1069 = vsub.f32 %v728, %v1068
    %1070 = vmatmul.mubr.f32.gmra.mrb[0].mxu0 %v1069
    %v1071 = vpop.f32.mrb[0].mxu0
    %v1072 = vadd.f32 %v968, %v1071
    %v1073 = vpop.f32.mrb[0].mxu0
    %1074 = vdwg.mxu0
    %1075 = vmatprep.subr.mxu0 0.0
    %v1076 = vand.u32 %v52, 4294901760
    %1077 = vmatpush1.msra.mxu0 %v1076
    %1078 = vmatprep.subr.mxu0 0.0
    %v1079 = vand.u32 %v53, 4294901760
    %1080 = vmatpush1.msra.mxu0 %v1079
    %1081 = vmatprep.subr.mxu0 0.0
    %v1082 = vand.u32 %v54, 4294901760
    %1083 = vmatpush1.msra.mxu0 %v1082
    %1084 = vmatprep.subr.mxu0 0.0
    %v1085 = vand.u32 %v55, 4294901760
    %1086 = vmatpush1.msra.mxu0 %v1085
    %1087 = vmatprep.subr.mxu0 0.0
    %v1088 = vand.u32 %v56, 4294901760
    %1089 = vmatpush1.msra.mxu0 %v1088
    %1090 = vmatprep.subr.mxu0 0.0
    %v1091 = vand.u32 %v57, 4294901760
    %1092 = vmatpush1.msra.mxu0 %v1091
    %1093 = vmatprep.subr.mxu0 0.0
    %v1094 = vand.u32 %v58, 4294901760
    %1095 = vmatpush1.msra.mxu0 %v1094
    %1096 = vmatprep.subr.mxu0 0.0
    %v1097 = vand.u32 %v59, 4294901760
    %1098 = vmatpush1.msra.mxu0 %v1097
    %1099 = vmatprep.subr.mxu0 0.0
    %v1100 = vand.u32 %v60, 4294901760
    %1101 = vmatpush1.msra.mxu0 %v1100
    %1102 = vmatprep.subr.mxu0 0.0
    %v1103 = vand.u32 %v61, 4294901760
    %1104 = vmatpush1.msra.mxu0 %v1103
    %1105 = vmatprep.subr.mxu0 0.0
    %v1106 = vand.u32 %v62, 4294901760
    %1107 = vmatpush1.msra.mxu0 %v1106
    %1108 = vmatprep.subr.mxu0 0.0
    %v1109 = vand.u32 %v63, 4294901760
    %1110 = vmatpush1.msra.mxu0 %v1109
    %1111 = vmatprep.subr.mxu0 0.0
    %v1112 = vand.u32 %v64, 4294901760
    %1113 = vmatpush1.msra.mxu0 %v1112
    %1114 = vmatprep.subr.mxu0 0.0
    %v1115 = vand.u32 %v65, 4294901760
    %1116 = vmatpush1.msra.mxu0 %v1115
    %1117 = vmatprep.subr.mxu0 0.0
    %v1118 = vand.u32 %v66, 4294901760
    %1119 = vmatpush1.msra.mxu0 %v1118
    %1120 = vmatprep.subr.mxu0 0.0
    %v1121 = vand.u32 %v67, 4294901760
    %1122 = vmatpush1.msra.mxu0 %v1121
    %1123 = vmatprep.subr.mxu0 0.0
    %1124 = vmatpush1.msra.mxu0 0.0
    %1125 = vmatprep.subr.mxu0 0.0
    %1126 = vmatpush1.msra.mxu0 0.0
    %1127 = vmatprep.subr.mxu0 0.0
    %1128 = vmatpush1.msra.mxu0 0.0
    %1129 = vmatprep.subr.mxu0 0.0
    %1130 = vmatpush1.msra.mxu0 0.0
    %1131 = vmatprep.subr.mxu0 0.0
    %1132 = vmatpush1.msra.mxu0 0.0
    %1133 = vmatprep.subr.mxu0 0.0
    %1134 = vmatpush1.msra.mxu0 0.0
    %1135 = vmatprep.subr.mxu0 0.0
    %1136 = vmatpush1.msra.mxu0 0.0
    %1137 = vmatprep.subr.mxu0 0.0
    %1138 = vmatpush1.msra.mxu0 0.0
    %1139 = vmatprep.subr.mxu0 0.0
    %1140 = vmatpush1.msra.mxu0 0.0
    %1141 = vmatprep.subr.mxu0 0.0
    %1142 = vmatpush1.msra.mxu0 0.0
    %1143 = vmatprep.subr.mxu0 0.0
    %1144 = vmatpush1.msra.mxu0 0.0
    %1145 = vmatprep.subr.mxu0 0.0
    %1146 = vmatpush1.msra.mxu0 0.0
    %1147 = vmatprep.subr.mxu0 0.0
    %1148 = vmatpush1.msra.mxu0 0.0
    %1149 = vmatprep.subr.mxu0 0.0
    %1150 = vmatpush1.msra.mxu0 0.0
    %1151 = vmatprep.subr.mxu0 0.0
    %1152 = vmatpush1.msra.mxu0 0.0
    %1153 = vmatprep.subr.mxu0 0.0
    %1154 = vmatpush1.msra.mxu0 0.0
    %1155 = vmatprep.mubr.f32.mxu0 0.0
    %v1156 = vand.u32 %v728, 4294901760
    %v1157 = vsub.f32 %v728, %v1156
    %v1158 = vand.u32 %v1157, 4294901760
    %1159 = vmatmul.mubr.f32.gmra.mrb[0].mxu0 %v1158
    %v1160 = vpop.f32.mrb[0].mxu0
    %v1161 = vadd.f32 %v1072, %v1160
    %v1162 = vpop.f32.mrb[0].mxu0
    %1163 = vdwg.mxu0
    %1164 = vmatprep.subr.mxu0 0.0
    %v1165 = vand.u32 %v52, 4294901760
    %v1166 = vsub.f32 %v52, %v1165
    %v1167 = vand.u32 %v1166, 4294901760
    %1168 = vmatpush1.msra.mxu0 %v1167
    %1169 = vmatprep.subr.mxu0 0.0
    %v1170 = vand.u32 %v53, 4294901760
    %v1171 = vsub.f32 %v53, %v1170
    %v1172 = vand.u32 %v1171, 4294901760
    %1173 = vmatpush1.msra.mxu0 %v1172
    %1174 = vmatprep.subr.mxu0 0.0
    %v1175 = vand.u32 %v54, 4294901760
    %v1176 = vsub.f32 %v54, %v1175
    %v1177 = vand.u32 %v1176, 4294901760
    %1178 = vmatpush1.msra.mxu0 %v1177
    %1179 = vmatprep.subr.mxu0 0.0
    %v1180 = vand.u32 %v55, 4294901760
    %v1181 = vsub.f32 %v55, %v1180
    %v1182 = vand.u32 %v1181, 4294901760
    %1183 = vmatpush1.msra.mxu0 %v1182
    %1184 = vmatprep.subr.mxu0 0.0
    %v1185 = vand.u32 %v56, 4294901760
    %v1186 = vsub.f32 %v56, %v1185
    %v1187 = vand.u32 %v1186, 4294901760
    %1188 = vmatpush1.msra.mxu0 %v1187
    %1189 = vmatprep.subr.mxu0 0.0
    %v1190 = vand.u32 %v57, 4294901760
    %v1191 = vsub.f32 %v57, %v1190
    %v1192 = vand.u32 %v1191, 4294901760
    %1193 = vmatpush1.msra.mxu0 %v1192
    %1194 = vmatprep.subr.mxu0 0.0
    %v1195 = vand.u32 %v58, 4294901760
    %v1196 = vsub.f32 %v58, %v1195
    %v1197 = vand.u32 %v1196, 4294901760
    %1198 = vmatpush1.msra.mxu0 %v1197
    %1199 = vmatprep.subr.mxu0 0.0
    %v1200 = vand.u32 %v59, 4294901760
    %v1201 = vsub.f32 %v59, %v1200
    %v1202 = vand.u32 %v1201, 4294901760
    %1203 = vmatpush1.msra.mxu0 %v1202
    %1204 = vmatprep.subr.mxu0 0.0
    %v1205 = vand.u32 %v60, 4294901760
    %v1206 = vsub.f32 %v60, %v1205
    %v1207 = vand.u32 %v1206, 4294901760
    %1208 = vmatpush1.msra.mxu0 %v1207
    %1209 = vmatprep.subr.mxu0 0.0
    %v1210 = vand.u32 %v61, 4294901760
    %v1211 = vsub.f32 %v61, %v1210
    %v1212 = vand.u32 %v1211, 4294901760
    %1213 = vmatpush1.msra.mxu0 %v1212
    %1214 = vmatprep.subr.mxu0 0.0
    %v1215 = vand.u32 %v62, 4294901760
    %v1216 = vsub.f32 %v62, %v1215
    %v1217 = vand.u32 %v1216, 4294901760
    %1218 = vmatpush1.msra.mxu0 %v1217
    %1219 = vmatprep.subr.mxu0 0.0
    %v1220 = vand.u32 %v63, 4294901760
    %v1221 = vsub.f32 %v63, %v1220
    %v1222 = vand.u32 %v1221, 4294901760
    %1223 = vmatpush1.msra.mxu0 %v1222
    %1224 = vmatprep.subr.mxu0 0.0
    %v1225 = vand.u32 %v64, 4294901760
    %v1226 = vsub.f32 %v64, %v1225
    %v1227 = vand.u32 %v1226, 4294901760
    %1228 = vmatpush1.msra.mxu0 %v1227
    %1229 = vmatprep.subr.mxu0 0.0
    %v1230 = vand.u32 %v65, 4294901760
    %v1231 = vsub.f32 %v65, %v1230
    %v1232 = vand.u32 %v1231, 4294901760
    %1233 = vmatpush1.msra.mxu0 %v1232
    %1234 = vmatprep.subr.mxu0 0.0
    %v1235 = vand.u32 %v66, 4294901760
    %v1236 = vsub.f32 %v66, %v1235
    %v1237 = vand.u32 %v1236, 4294901760
    %1238 = vmatpush1.msra.mxu0 %v1237
    %1239 = vmatprep.subr.mxu0 0.0
    %v1240 = vand.u32 %v67, 4294901760
    %v1241 = vsub.f32 %v67, %v1240
    %v1242 = vand.u32 %v1241, 4294901760
    %1243 = vmatpush1.msra.mxu0 %v1242
    %1244 = vmatprep.subr.mxu0 0.0
    %1245 = vmatpush1.msra.mxu0 0.0
    %1246 = vmatprep.subr.mxu0 0.0
    %1247 = vmatpush1.msra.mxu0 0.0
    %1248 = vmatprep.subr.mxu0 0.0
    %1249 = vmatpush1.msra.mxu0 0.0
    %1250 = vmatprep.subr.mxu0 0.0
    %1251 = vmatpush1.msra.mxu0 0.0
    %1252 = vmatprep.subr.mxu0 0.0
    %1253 = vmatpush1.msra.mxu0 0.0
    %1254 = vmatprep.subr.mxu0 0.0
    %1255 = vmatpush1.msra.mxu0 0.0
    %1256 = vmatprep.subr.mxu0 0.0
    %1257 = vmatpush1.msra.mxu0 0.0
    %1258 = vmatprep.subr.mxu0 0.0
    %1259 = vmatpush1.msra.mxu0 0.0
    %1260 = vmatprep.subr.mxu0 0.0
    %1261 = vmatpush1.msra.mxu0 0.0
    %1262 = vmatprep.subr.mxu0 0.0
    %1263 = vmatpush1.msra.mxu0 0.0
    %1264 = vmatprep.subr.mxu0 0.0
    %1265 = vmatpush1.msra.mxu0 0.0
    %1266 = vmatprep.subr.mxu0 0.0
    %1267 = vmatpush1.msra.mxu0 0.0
    %1268 = vmatprep.subr.mxu0 0.0
    %1269 = vmatpush1.msra.mxu0 0.0
    %1270 = vmatprep.subr.mxu0 0.0
    %1271 = vmatpush1.msra.mxu0 0.0
    %1272 = vmatprep.subr.mxu0 0.0
    %1273 = vmatpush1.msra.mxu0 0.0
    %1274 = vmatprep.subr.mxu0 0.0
    %1275 = vmatpush1.msra.mxu0 0.0
    %1276 = vmatprep.mubr.f32.mxu0 0.0
    %v1277 = vand.u32 %v728, 4294901760
    %1278 = vmatmul.mubr.f32.gmra.mrb[0].mxu0 %v1277
    %v1279 = vpop.f32.mrb[0].mxu0
    %v1280 = vadd.f32 %v1161, %v1279
    %v1281 = vpop.f32.mrb[0].mxu0
    %1282 = vdwg.mxu0
    %1283 = vmatprep.subr.mxu0 0.0
    %v1284 = vand.u32 %v52, 4294901760
    %1285 = vmatpush1.msra.mxu0 %v1284
    %1286 = vmatprep.subr.mxu0 0.0
    %v1287 = vand.u32 %v53, 4294901760
    %1288 = vmatpush1.msra.mxu0 %v1287
    %1289 = vmatprep.subr.mxu0 0.0
    %v1290 = vand.u32 %v54, 4294901760
    %1291 = vmatpush1.msra.mxu0 %v1290
    %1292 = vmatprep.subr.mxu0 0.0
    %v1293 = vand.u32 %v55, 4294901760
    %1294 = vmatpush1.msra.mxu0 %v1293
    %1295 = vmatprep.subr.mxu0 0.0
    %v1296 = vand.u32 %v56, 4294901760
    %1297 = vmatpush1.msra.mxu0 %v1296
    %1298 = vmatprep.subr.mxu0 0.0
    %v1299 = vand.u32 %v57, 4294901760
    %1300 = vmatpush1.msra.mxu0 %v1299
    %1301 = vmatprep.subr.mxu0 0.0
    %v1302 = vand.u32 %v58, 4294901760
    %1303 = vmatpush1.msra.mxu0 %v1302
    %1304 = vmatprep.subr.mxu0 0.0
    %v1305 = vand.u32 %v59, 4294901760
    %1306 = vmatpush1.msra.mxu0 %v1305
    %1307 = vmatprep.subr.mxu0 0.0
    %v1308 = vand.u32 %v60, 4294901760
    %1309 = vmatpush1.msra.mxu0 %v1308
    %1310 = vmatprep.subr.mxu0 0.0
    %v1311 = vand.u32 %v61, 4294901760
    %1312 = vmatpush1.msra.mxu0 %v1311
    %1313 = vmatprep.subr.mxu0 0.0
    %v1314 = vand.u32 %v62, 4294901760
    %1315 = vmatpush1.msra.mxu0 %v1314
    %1316 = vmatprep.subr.mxu0 0.0
    %v1317 = vand.u32 %v63, 4294901760
    %1318 = vmatpush1.msra.mxu0 %v1317
    %1319 = vmatprep.subr.mxu0 0.0
    %v1320 = vand.u32 %v64, 4294901760
    %1321 = vmatpush1.msra.mxu0 %v1320
    %1322 = vmatprep.subr.mxu0 0.0
    %v1323 = vand.u32 %v65, 4294901760
    %1324 = vmatpush1.msra.mxu0 %v1323
    %1325 = vmatprep.subr.mxu0 0.0
    %v1326 = vand.u32 %v66, 4294901760
    %1327 = vmatpush1.msra.mxu0 %v1326
    %1328 = vmatprep.subr.mxu0 0.0
    %v1329 = vand.u32 %v67, 4294901760
    %1330 = vmatpush1.msra.mxu0 %v1329
    %1331 = vmatprep.subr.mxu0 0.0
    %1332 = vmatpush1.msra.mxu0 0.0
    %1333 = vmatprep.subr.mxu0 0.0
    %1334 = vmatpush1.msra.mxu0 0.0
    %1335 = vmatprep.subr.mxu0 0.0
    %1336 = vmatpush1.msra.mxu0 0.0
    %1337 = vmatprep.subr.mxu0 0.0
    %1338 = vmatpush1.msra.mxu0 0.0
    %1339 = vmatprep.subr.mxu0 0.0
    %1340 = vmatpush1.msra.mxu0 0.0
    %1341 = vmatprep.subr.mxu0 0.0
    %1342 = vmatpush1.msra.mxu0 0.0
    %1343 = vmatprep.subr.mxu0 0.0
    %1344 = vmatpush1.msra.mxu0 0.0
    %1345 = vmatprep.subr.mxu0 0.0
    %1346 = vmatpush1.msra.mxu0 0.0
    %1347 = vmatprep.subr.mxu0 0.0
    %1348 = vmatpush1.msra.mxu0 0.0
    %1349 = vmatprep.subr.mxu0 0.0
    %1350 = vmatpush1.msra.mxu0 0.0
    %1351 = vmatprep.subr.mxu0 0.0
    %1352 = vmatpush1.msra.mxu0 0.0
    %1353 = vmatprep.subr.mxu0 0.0
    %1354 = vmatpush1.msra.mxu0 0.0
    %1355 = vmatprep.subr.mxu0 0.0
    %1356 = vmatpush1.msra.mxu0 0.0
    %1357 = vmatprep.subr.mxu0 0.0
    %1358 = vmatpush1.msra.mxu0 0.0
    %1359 = vmatprep.subr.mxu0 0.0
    %1360 = vmatpush1.msra.mxu0 0.0
    %1361 = vmatprep.subr.mxu0 0.0
    %1362 = vmatpush1.msra.mxu0 0.0
    %1363 = vmatprep.mubr.f32.mxu0 0.0
    %v1364 = vand.u32 %v728, 4294901760
    %1365 = vmatmul.mubr.f32.gmra.mrb[0].mxu0 %v1364
    %v1366 = vpop.f32.mrb[0].mxu0
    %v1367 = vadd.f32 %v1280, %v1366
    %v1368 = vpop.f32.mrb[0].mxu0
    %1369 = vdwg.mxu0
    %v1370 = vrsqrt.pop %v1367
    %v1371 = vmul.f32 %v1367, %v1370
    %vm1372 = vcmp.eq.f32.partialorder %v1367, inf
    %v1373 = vsel %vm1372, %v1367, %v1371
    %vm1374 = vcmp.eq.f32.partialorder %v1367, 0.0
    %v1375 = vand.u32 %v1367, 2147483648
    %v1376 = vsel %vm1374, %v1375, %v1373
    %v1377 = vadd.f32 %v1376, 1e-05
    %v1378 = vrcp.pop %v1377
    %v1379 = vmul.f32 %v1377, %v1378
    %v1380 = vsub.f32 2.0, %v1379
    %v1381 = vmul.f32 %v1378, %v1380
    %v1382 = vmul.f32 %v727, %v1381
    %v1383 = vmul.f32 %v72, %v1382
    %v1384 = vadd.f32 %v80, %v1383
    %v1385 = vmul.f32 %v76, %v1382
    %v1386 = vadd.f32 %v84, %v1385
    %v1387 = vmax.f32 %v1384, -60.0
    %v1388 = vsub.f32 0.0, %v1387
    %v1389 = vmul.f32 %v1388, 1.442695
    %v1390 = vpow.pop %v1389
    %v1391 = vadd.f32 %v1390, 1.0
    %v1392 = vrcp.pop %v1391
    %v1393 = vmul.f32 %v1391, %v1392
    %v1394 = vsub.f32 2.0, %v1393
    %v1395 = vmul.f32 %v1392, %v1394
    %v1396 = vmul.f32 %v1395, %v1386
    %v1397 = vadd.f32 %v1396, %v85
    %1398 = vst [vmem:[#allocation8] sm:$0xff] %v1397
    // Predicated region
    $region26: #{tpu_custom_call.1} parent=1 // pred_check
      _
    $region27: #{tpu_custom_call.1} parent=1 // pred_check_branch
      %1400 = sbr.rel (0) target = $region29
    $region28: #{tpu_custom_call.1} parent=1 // pred_region
      %s1402 = ssub.s32 128, 128
      %1403 = vsyncadd [#allocation4], %s1402
      %s1405 = sshll.u32 [#allocation8], 4
      %s1406 = int_to_ptr.vmem [resolvable:$true] %s1405
      %1408 = dma.vmem_to_hbm [thread:$0]  %s1406, 128, %s3, [#allocation4]
    $region29: #{tpu_custom_call.1} parent=1 // pred_fallthru
      _
    // Predicated region
    $region30: #{tpu_custom_call.1} parent=1 // pred_check
      _
    $region31: #{tpu_custom_call.1} parent=1 // pred_check_branch
      %1410 = sbr.rel (0) target = $region33
    $region32: #{tpu_custom_call.1} parent=1 // pred_region
      %1411 = dma.done [#allocation4], 128
    $region33: #{tpu_custom_call.1} parent=1 // pred_fallthru
      _
    %1412 = vsyncpa [#allocation3], 1
    %1413 = vsyncpa [#allocation6], 1
    %1414 = vsyncpa [#allocation4], 1

</llo_original>
